<compile_context>
chip_gen: v7x
topology: tpu7x:2x2x1
jax: 0.10.0
libtpu: 0.0.40
codegen_flags: <defaults>
</compile_context>

<pallas_src>
import functools
import math

import jax
import jax.numpy as jnp
from jax import lax
from jax.experimental import pallas as pl
from jax.experimental.pallas import tpu as pltpu


def _round_up(x, m):
    return ((x + m - 1) // m) * m


def _pick_tile(padded, cap):
    """Largest multiple of 128 that divides `padded` (itself a multiple of 128)
    and does not exceed `cap` -> the grid tiles the padded dim exactly."""
    units = padded // 128
    best = 1
    for d in range(1, units + 1):
        if units % d == 0 and 128 * d <= cap:
            best = d
    return 128 * best


# ----------------------------- Pallas kernels -------------------------------

def _epilogue(y, b, activation, scale):
    y = y + b
    if activation == "relu":
        y = jnp.maximum(y, 0.0)
    elif activation == "tanh":
        y = jnp.tanh(scale * y)
    return y


def _gemm_single_k_kernel(x_ref, w_ref, b_ref, o_ref, *, activation, scale):
    """Whole K reduction in one step: no accumulator, no output revisit."""
    y = jnp.dot(x_ref[...], w_ref[...], preferred_element_type=jnp.float32)
    o_ref[...] = _epilogue(y, b_ref[...], activation, scale).astype(o_ref.dtype)


def _gemm_multi_k_kernel(x_ref, w_ref, b_ref, o_ref, acc_ref, *, activation, scale):
    """K-tiled GEMM with an f32 VMEM accumulator; bias/act/cast fused on the
    last K step (first step stores the partial directly: no zeros round-trip)."""
    k = pl.program_id(2)
    part = jnp.dot(x_ref[...], w_ref[...], preferred_element_type=jnp.float32)

    @pl.when(k == 0)
    def _():
        acc_ref[...] = part

    @pl.when(k != 0)
    def _():
        acc_ref[...] += part

    @pl.when(k == pl.num_programs(2) - 1)
    def _():
        o_ref[...] = _epilogue(acc_ref[...], b_ref[...],
                               activation, scale).astype(o_ref.dtype)


def pallas_matmul_bias_act(x, w_padded, b_padded, n_out, *, activation="none",
                           scale=1.0, tm=256, tn=512, tk=4608,
                           out_dtype=jnp.bfloat16):
    """act(x @ W + b) with a fused, tiled Pallas GEMM.

    x: (M, K) any float dtype (cast to bf16, f32 accumulation on the MXU).
    w_padded: (Kp, Np) bf16, zero-padded at init.  b_padded: (1, Np) f32.
    n_out: true output width (result cropped to (M, n_out)).
    tm/tn/tk are caps; actual tiles are multiples of 128 dividing Kp/Np exactly.
    """
    Kp, Np = w_padded.shape
    M, K = x.shape
    assert K <= Kp and n_out <= Np

    x = x.astype(jnp.bfloat16)
    tn = _pick_tile(Np, tn)
    tk = _pick_tile(Kp, tk)
    tm = min(tm, _round_up(M, 16))        # bf16 packs 2 rows / sublane
    Mp = _round_up(M, tm)

    xp = x if (Mp == M and Kp == K) else jnp.pad(x, ((0, Mp - M), (0, Kp - K)))

    grid = (Mp // tm, Np // tn, Kp // tk)
    multi_k = grid[2] > 1
    kernel = _gemm_multi_k_kernel if multi_k else _gemm_single_k_kernel
    scratch = (pltpu.VMEM((tm, tn), jnp.float32),) if multi_k else ()

    out = pl.pallas_call(
        functools.partial(kernel, activation=activation, scale=scale),
        out_shape=jax.ShapeDtypeStruct((Mp, Np), out_dtype),
        grid_spec=pltpu.PrefetchScalarGridSpec(
            num_scalar_prefetch=0,
            grid=grid,
            in_specs=[pl.BlockSpec((tm, tk), lambda i, j, k: (i, k)),
                      pl.BlockSpec((tk, tn), lambda i, j, k: (k, j)),
                      pl.BlockSpec((1, tn), lambda i, j, k: (0, j))],
            out_specs=pl.BlockSpec((tm, tn), lambda i, j, k: (i, j)),
            scratch_shapes=scratch),
        compiler_params=pltpu.CompilerParams(
            dimension_semantics=("parallel", "parallel", "arbitrary"),
            vmem_limit_bytes=32 * 1024 * 1024),
    )(xp, w_padded, b_padded)
    return out[:M, :n_out]


# ------------------------------ Glue (JAX) ----------------------------------

def conv2d_relu_pallas(x_nhwc, w_padded, b_padded, cout, ksize, pad):
    """Stride-1 NHWC conv via bf16 im2col + fused Pallas GEMM (bias + ReLU).
    TODO(synk): patches are HBM-materialised; folding (ky,kx) into the GEMM
    reduction axis would remove that traffic."""
    n, H, W, Cin = x_nhwc.shape
    Ho = H + 2 * pad - ksize + 1
    Wo = W + 2 * pad - ksize + 1
    xp = jnp.pad(x_nhwc, ((0, 0), (pad, pad), (pad, pad), (0, 0)))
    cols = [xp[:, ky:ky + Ho, kx:kx + Wo, :]
            for ky in range(ksize) for kx in range(ksize)]
    patches = jnp.concatenate(cols, axis=-1).reshape(n * Ho * Wo,
                                                     ksize * ksize * Cin)
    M = n * Ho * Wo
    # Keep every conv GEMM at >= 4 grid steps (pipelining + v7x dual-TC).
    if M >= 1024:
        tm, tn = 256, 256
    else:
        tm, tn = 176, 128
    out = pallas_matmul_bias_act(patches, w_padded, b_padded, cout,
                                 activation="relu", tm=tm, tn=tn, tk=4608)
    return out.reshape(n, Ho, Wo, cout)


def conv1_relu_xla(x_nhwc, w_hwio, b):
    """First AlexNet conv (11x11, s4, Cin=3) delegated to XLA's native conv
    (im2col is a 121x blow-up with a lane-sparse Cin=3).
    TODO(synk): this layer is not a Pallas kernel."""
    y = lax.conv_general_dilated(
        x_nhwc, w_hwio, window_strides=(4, 4), padding=[(2, 2), (2, 2)],
        dimension_numbers=("NHWC", "HWIO", "NHWC"),
        preferred_element_type=jnp.float32)
    return jnp.maximum(y + b, 0.0).astype(jnp.bfloat16)


def maxpool_3x3_s2(x_nhwc):
    """MaxPool2d(kernel=3, stride=2): tree of jnp.maximum over 9 strided views
    (XLA fuses into one pass, no (9, M, C) stack in HBM)."""
    N, H, W, C = x_nhwc.shape
    Ho, Wo = (H - 3) // 2 + 1, (W - 3) // 2 + 1
    out = None
    for dy in range(3):
        for dx in range(3):
            v = x_nhwc[:, dy:dy + 2 * (Ho - 1) + 1:2,
                        dx:dx + 2 * (Wo - 1) + 1:2, :]
            out = v if out is None else jnp.maximum(out, v)
    return out


# ------------------------------ Model ----------------------------------------

CONV_CFG = [(11, 4, 2), (5, 1, 2), (3, 1, 1), (3, 1, 1), (3, 1, 1)]
CONV_CHANNELS = [(3, 64), (64, 192), (192, 384), (384, 256), (256, 256)]
POOL_AFTER = {0, 1, 4}
FC_IN = 256 * 6 * 6


def _pad_gemm_layer(w_mat_f32, b_vec_f32):
    """bf16-cast + zero-pad a GEMM weight/bias to (Kp, Np)/(1, Np) once at init."""
    K, N = w_mat_f32.shape
    Kp, Np = _round_up(K, 128), _round_up(N, 128)
    w = jnp.pad(w_mat_f32.astype(jnp.bfloat16), ((0, Kp - K), (0, Np - N)))
    b = jnp.pad(b_vec_f32.astype(jnp.float32).reshape(1, N),
                ((0, 0), (0, Np - N)))
    return w, b


def init_params(key, hash_bit):
    keys = jax.random.split(key, 8)
    k1 = CONV_CFG[0][0]
    cin1, cout1 = CONV_CHANNELS[0]
    conv1_w = (jax.random.normal(keys[0], (k1, k1, cin1, cout1), jnp.float32)
               * 0.01).astype(jnp.bfloat16)
    conv1_b = jnp.zeros((cout1,), jnp.float32)
    convs = []
    for i in range(1, 5):
        (cin, cout), (k, _, _) = CONV_CHANNELS[i], CONV_CFG[i]
        w = jax.random.normal(keys[i], (k, k, cin, cout), jnp.float32) * 0.01
        convs.append(_pad_gemm_layer(w.reshape(k * k * cin, cout),
                                     jnp.zeros((cout,), jnp.float32)))
    fc1 = _pad_gemm_layer(
        jax.random.normal(keys[5], (FC_IN, 4096), jnp.float32) * 0.01,
        jnp.zeros((4096,), jnp.float32))
    fc2 = _pad_gemm_layer(
        jax.random.normal(keys[6], (4096, 4096), jnp.float32) * 0.01,
        jnp.zeros((4096,), jnp.float32))
    # hash_layer: weight ~ N(0, 0.01), bias = 0 (matches the module __init__)
    hsh = _pad_gemm_layer(
        jax.random.normal(keys[7], (4096, hash_bit), jnp.float32) * 0.01,
        jnp.zeros((hash_bit,), jnp.float32))
    return {"conv1": (conv1_w, conv1_b), "convs": convs,
            "fc1": fc1, "fc2": fc2, "hash": hsh}


def alexnet_fc_forward(x_nchw, params, *, scale, hash_bit):
    # NCHW -> NHWC, bf16 activations throughout the feature path.
    x = jnp.transpose(x_nchw, (0, 2, 3, 1)).astype(jnp.bfloat16)
    x = conv1_relu_xla(x, *params["conv1"])
    x = maxpool_3x3_s2(x)
    for i, (w, b) in enumerate(params["convs"], start=1):
        ksize, _, padv = CONV_CFG[i]
        cout = CONV_CHANNELS[i][1]
        x = conv2d_relu_pallas(x, w, b, cout, ksize, padv)
        if i in POOL_AFTER:
            x = maxpool_3x3_s2(x)
    n = x.shape[0]
    # PyTorch's x.view(N, 256*6*6) flattens NCHW order -> transpose back first.
    x = jnp.transpose(x, (0, 3, 1, 2)).reshape(n, FC_IN)
    # classifier: Dropout (identity in eval), Linear+ReLU, Dropout, Linear+ReLU
    # TODO(synk): training-mode dropout / iter_num mutation not implemented.
    x = pallas_matmul_bias_act(x, *params["fc1"], 4096, activation="relu",
                               tn=512, tk=9216)
    x = pallas_matmul_bias_act(x, *params["fc2"], 4096, activation="relu",
                               tn=1024, tk=4608)
    # hash layer + tanh(scale * y), fused in the GEMM epilogue; tk=1024 keeps a
    # 4-step grid so the weight stream still pipelines.
    y = pallas_matmul_bias_act(x, *params["hash"], hash_bit, activation="tanh",
                               scale=scale, tn=128, tk=1024,
                               out_dtype=jnp.float32)
    return y


# ------------------------------ Self test ------------------------------------

def _self_test_gemm():
    """Tolerance check of the fused GEMM (both single-k and multi-k paths)
    against an f32 reference on the same bf16-rounded operands."""
    kx, kw = jax.random.split(jax.random.PRNGKey(1))
    M, K, N = 64, 200, 96
    x = jax.random.normal(kx, (M, K), jnp.float32)
    w = jax.random.normal(kw, (K, N), jnp.float32) * 0.1
    b = jnp.linspace(-1.0, 1.0, N, dtype=jnp.float32)
    wp, bp = _pad_gemm_layer(w, b)
    ref = jnp.maximum(
        x.astype(jnp.bfloat16).astype(jnp.float32)
        @ wp[:K, :N].astype(jnp.float32) + b, 0.0)
    for tk in (4608, 128):                      # single-k and multi-k kernels
        out = pallas_matmul_bias_act(x, wp, bp, N, activation="relu",
                                     tk=tk, out_dtype=jnp.float32)
        err = float(jnp.max(jnp.abs(out - ref)))
        assert jnp.allclose(out, ref, rtol=2e-2, atol=2e-2), err


if __name__ == "__main__":
    _self_test_gemm()

    hash_bit = 32
    key = jax.random.PRNGKey(0)
    pkey, xkey = jax.random.split(key)
    params = init_params(pkey, hash_bit)
    # AlexNet's 256*6*6 flatten requires the canonical 3x224x224 input.
    x = jax.random.normal(xkey, (2, 3, 224, 224), jnp.float32)

    # Module scale schedule with iter_num = 0 (eval): 0 % 200 == 0 -> update.
    iter_num, init_scale, gamma, power, step_size = 0, 1.0, 0.005, 0.5, 200
    scale = init_scale
    if iter_num % step_size == 0:
        scale = init_scale * math.pow(1.0 + gamma * iter_num, power)

    fwd = jax.jit(functools.partial(alexnet_fc_forward,
                                    scale=scale, hash_bit=hash_bit))
    y = jax.block_until_ready(fwd(x, params))
    assert y.shape == (2, hash_bit), y.shape
    assert bool(jnp.all(jnp.isfinite(y)))
    assert bool(jnp.all(jnp.abs(y) <= 1.0))  # tanh range
    print("KERNEL_OK")
</pallas_src>

<mosaic_0001>
module attributes {stable_mosaic.version = 11 : i64} {
  func.func @_gemm_single_k_kernel(%arg0: i32, %arg1: i32, %arg2: i32, %arg3: memref<64x256xbf16, #tpu.memory_space<vmem>>, %arg4: memref<256x128xbf16, #tpu.memory_space<vmem>>, %arg5: memref<1x128xf32, #tpu.memory_space<vmem>>, %arg6: memref<64x128xf32, #tpu.memory_space<vmem>>) attributes {dimension_semantics = [#tpu.dimension_semantics<parallel>, #tpu.dimension_semantics<parallel>, #tpu.dimension_semantics<arbitrary>], iteration_bounds = array<i64: 1, 1, 1>, scalar_prefetch = 0 : i64, scratch_operands = 0 : i64, tpu.core_type = #tpu.core_type<tc>, window_params = [{transform_indices = @transform_0, window_bounds = array<i64: 64, 256>}, {transform_indices = @transform_1, window_bounds = array<i64: 256, 128>}, {transform_indices = @transform_2, window_bounds = array<i64: 1, 128>}, {transform_indices = @transform_3, window_bounds = array<i64: 64, 128>}]} {
    %c0 = arith.constant 0 : index
    %c0_0 = arith.constant 0 : index
    %0 = vector.load %arg3[%c0, %c0_0] : memref<64x256xbf16, #tpu.memory_space<vmem>>, vector<64x256xbf16>
    %c0_1 = arith.constant 0 : index
    %c0_2 = arith.constant 0 : index
    %1 = vector.load %arg4[%c0_1, %c0_2] : memref<256x128xbf16, #tpu.memory_space<vmem>>, vector<256x128xbf16>
    %cst = arith.constant dense<0.000000e+00> : vector<64x128xf32>
    %2 = tpu.matmul %0, %1, %cst {dimension_numbers = #tpu.dot_dimension_numbers<[1], [0], [0], [1], [0, 0, 1, 1], [], []>} : vector<64x256xbf16>, vector<256x128xbf16>, vector<64x128xf32> -> vector<64x128xf32>
    %c0_3 = arith.constant 0 : index
    %c0_4 = arith.constant 0 : index
    %3 = vector.load %arg5[%c0_3, %c0_4] : memref<1x128xf32, #tpu.memory_space<vmem>>, vector<1x128xf32>
    %4 = vector.broadcast %3 : vector<1x128xf32> to vector<64x128xf32>
    %5 = arith.addf %2, %4 : vector<64x128xf32>
    %cst_5 = arith.constant 0.000000e+00 : f32
    %6 = vector.broadcast %cst_5 : f32 to vector<64x128xf32>
    %7 = arith.maximumf %5, %6 : vector<64x128xf32>
    %c0_6 = arith.constant 0 : index
    %c0_7 = arith.constant 0 : index
    %8 = vector.load %arg6[%c0_6, %c0_7] : memref<64x128xf32, #tpu.memory_space<vmem>>, vector<64x128xf32>
    tpu.vector_store %arg6[%c0_6, %c0_7], %7 {strides = array<i32>} : memref<64x128xf32, #tpu.memory_space<vmem>>, vector<64x128xf32>,
    return
  }
  func.func @transform_0(%arg0: i32, %arg1: i32, %arg2: i32) -> (i32, i32) {
    %c0_i32 = arith.constant 0 : i32
    return %arg0, %arg2 : i32, i32
  }
  func.func @transform_1(%arg0: i32, %arg1: i32, %arg2: i32) -> (i32, i32) {
    %c0_i32 = arith.constant 0 : i32
    return %arg2, %arg1 : i32, i32
  }
  func.func @transform_2(%arg0: i32, %arg1: i32, %arg2: i32) -> (i32, i32) {
    %c0_i32 = arith.constant 0 : i32
    %c0_i32_0 = arith.constant 0 : i32
    return %c0_i32, %arg1 : i32, i32
  }
  func.func @transform_3(%arg0: i32, %arg1: i32, %arg2: i32) -> (i32, i32) {
    %c0_i32 = arith.constant 0 : i32
    return %arg0, %arg1 : i32, i32
  }
}

</mosaic_0001>

<llo_original>
// kernel: tpu_custom_call.1
$region0: #{tpu_custom_call.1}
  #allocation0 [shape = 'u32[]', space=smem, size = 0x4, offset = 0x4, fixed_abs, tag = 'smem constant byte address 0x4 - core index']
  #allocation1 [shape = 'u32[144,128]{1,0:T(1,128)}', space=vmem, size = 0x12000, scoped, tag = 'internal scratch']
  %s0 = inlined_call_operand.hbm [shape: bf16[64,256], index: 0, kind: input, shape index: {}]
  %s1 = inlined_call_operand.hbm [shape: bf16[256,128], index: 1, kind: input, shape index: {}]
  %s2 = inlined_call_operand.vmem [shape: f32[1,128], index: 2, kind: input, shape index: {}]
  %s3 = inlined_call_operand.hbm [shape: f32[64,128], index: 3, kind: output, shape index: {}]
  %s4 = sld [smem:[#allocation0]]
  $region30: #{tpu_custom_call.1} parent=0
    _
  %s6 = ssub.s32 1, %s4
  %s7 = scalar_select 0, %s6, %s4
  $region1: #{tpu_custom_call.1} parent=0
    #allocation2 [shape = 'u8[32768]{0}', space=vmem, size = 0x8000, scoped, tag = 'input window, operand 0, single buffered']
    #allocation3 [shape = 's32[1]{0}', space=sflag, size = 0x4, scoped, tag = 'scoped memory for tpu_custom_call.1']
    #allocation4 [shape = 's32[1]{0}', space=sflag, size = 0x4, scoped, tag = 'scoped memory for tpu_custom_call.1']
    #allocation5 [shape = 'u8[65536]{0}', space=vmem, size = 0x10000, scoped, tag = 'input window, operand 1, single buffered']
    #allocation6 [shape = 's32[1]{0}', space=sflag, size = 0x4, scoped, tag = 'scoped memory for tpu_custom_call.1']
    #allocation7 [shape = 'u8[32768]{0}', space=vmem, size = 0x8000, scoped, tag = 'output window, operand 0, single buffered']
    %8 = vsyncpa [#allocation3], 0
    %9 = vsyncpa [#allocation6], 0
    %10 = vsyncpa [#allocation4], 0
    // Predicated region
    $region2: #{tpu_custom_call.1} parent=1 // pred_check
      _
    $region3: #{tpu_custom_call.1} parent=1 // pred_check_branch
      %12 = sbr.rel (0) target = $region5
    $region4: #{tpu_custom_call.1} parent=1 // pred_region
      %s14 = ssub.s32 1024, 1024
      %15 = vsyncadd [#allocation3], %s14
      %s16 = sshll.u32 [#allocation2], 4
      %s17 = int_to_ptr.vmem [resolvable:$true] %s16
      %22 = dma.hbm_to_vmem [thread:$0]  %s0, 1024, %s17, [#allocation3], 128, 128, 8
    $region5: #{tpu_custom_call.1} parent=1 // pred_fallthru
      _
    // Predicated region
    $region6: #{tpu_custom_call.1} parent=1 // pred_check
      _
    $region7: #{tpu_custom_call.1} parent=1 // pred_check_branch
      %24 = sbr.rel (0) target = $region9
    $region8: #{tpu_custom_call.1} parent=1 // pred_region
      %s26 = ssub.s32 2048, 2048
      %27 = vsyncadd [#allocation6], %s26
      %s28 = sshll.u32 [#allocation5], 4
      %s29 = int_to_ptr.vmem [resolvable:$true] %s28
      %34 = dma.hbm_to_vmem [thread:$0]  %s1, 2048, %s29, [#allocation6], 64, 64, 4
    $region9: #{tpu_custom_call.1} parent=1 // pred_fallthru
      _
    // Predicated region
    $region10: #{tpu_custom_call.1} parent=1 // pred_check
      _
    $region11: #{tpu_custom_call.1} parent=1 // pred_check_branch
      %36 = sbr.rel (0) target = $region13
    $region12: #{tpu_custom_call.1} parent=1 // pred_region
      _
    $region13: #{tpu_custom_call.1} parent=1 // pred_fallthru
      _
    // Predicated region
    $region14: #{tpu_custom_call.1} parent=1 // pred_check
      _
    $region15: #{tpu_custom_call.1} parent=1 // pred_check_branch
      %38 = sbr.rel (0) target = $region17
    $region16: #{tpu_custom_call.1} parent=1 // pred_region
      %39 = dma.done [#allocation3], 1024
    $region17: #{tpu_custom_call.1} parent=1 // pred_fallthru
      _
    // Predicated region
    $region18: #{tpu_custom_call.1} parent=1 // pred_check
      _
    $region19: #{tpu_custom_call.1} parent=1 // pred_check_branch
      %41 = sbr.rel (0) target = $region21
    $region20: #{tpu_custom_call.1} parent=1 // pred_region
      %42 = dma.done [#allocation6], 2048
    $region21: #{tpu_custom_call.1} parent=1 // pred_fallthru
      _
    %v44 = vld [vmem:[#allocation2] sm:$0xff]
    %v45 = vld [vmem:[#allocation2 + $0x8] sm:$0xff]
    %v46 = vld [vmem:[#allocation2 + $0x10] sm:$0xff]
    %v47 = vld [vmem:[#allocation2 + $0x18] sm:$0xff]
    %v48 = vld [vmem:[#allocation2 + $0x20] sm:$0xff]
    %v49 = vld [vmem:[#allocation2 + $0x28] sm:$0xff]
    %v50 = vld [vmem:[#allocation2 + $0x30] sm:$0xff]
    %v51 = vld [vmem:[#allocation2 + $0x38] sm:$0xff]
    %v52 = vld [vmem:[#allocation5] sm:$0xf]
    %v53 = vld [vmem:[#allocation5 + $0x4] sm:$0xf]
    %v54 = vld [vmem:[#allocation5 + $0x8] sm:$0xf]
    %v55 = vld [vmem:[#allocation5 + $0xc] sm:$0xf]
    %v56 = vld [vmem:[#allocation5 + $0x10] sm:$0xf]
    %v57 = vld [vmem:[#allocation5 + $0x14] sm:$0xf]
    %v58 = vld [vmem:[#allocation5 + $0x18] sm:$0xf]
    %v59 = vld [vmem:[#allocation5 + $0x1c] sm:$0xf]
    %v60 = vld [vmem:[#allocation5 + $0x20] sm:$0xf]
    %v61 = vld [vmem:[#allocation5 + $0x24] sm:$0xf]
    %v62 = vld [vmem:[#allocation5 + $0x28] sm:$0xf]
    %v63 = vld [vmem:[#allocation5 + $0x2c] sm:$0xf]
    %v64 = vld [vmem:[#allocation5 + $0x30] sm:$0xf]
    %v65 = vld [vmem:[#allocation5 + $0x34] sm:$0xf]
    %v66 = vld [vmem:[#allocation5 + $0x38] sm:$0xf]
    %v67 = vld [vmem:[#allocation5 + $0x3c] sm:$0xf]
    %v68 = vld [vmem:[#allocation5 + $0x40] sm:$0xf]
    %v69 = vld [vmem:[#allocation5 + $0x44] sm:$0xf]
    %v70 = vld [vmem:[#allocation5 + $0x48] sm:$0xf]
    %v71 = vld [vmem:[#allocation5 + $0x4c] sm:$0xf]
    %v72 = vld [vmem:[#allocation5 + $0x50] sm:$0xf]
    %v73 = vld [vmem:[#allocation5 + $0x54] sm:$0xf]
    %v74 = vld [vmem:[#allocation5 + $0x58] sm:$0xf]
    %v75 = vld [vmem:[#allocation5 + $0x5c] sm:$0xf]
    %v76 = vld [vmem:[#allocation5 + $0x60] sm:$0xf]
    %v77 = vld [vmem:[#allocation5 + $0x64] sm:$0xf]
    %v78 = vld [vmem:[#allocation5 + $0x68] sm:$0xf]
    %v79 = vld [vmem:[#allocation5 + $0x6c] sm:$0xf]
    %v80 = vld [vmem:[#allocation5 + $0x70] sm:$0xf]
    %v81 = vld [vmem:[#allocation5 + $0x74] sm:$0xf]
    %v82 = vld [vmem:[#allocation5 + $0x78] sm:$0xf]
    %v83 = vld [vmem:[#allocation5 + $0x7c] sm:$0xf]
    %v84 = vld [vmem:[%s2] sm:$0x1]
    %v86 = vlaneseq
    %v87 = vshrl.u32 %v86, 7
    %v88 = vsub.s32 0, %v87
    %v89 = vrot.slane %v84, %v88
    %v99 = vunpack.c.l.b16 %v44
    %v100 = vunpack.c.h.b16 %v44
    %v101 = vunpack.c.l.b16 %v45
    %v102 = vunpack.c.h.b16 %v45
    %v103 = vunpack.c.l.b16 %v46
    %v104 = vunpack.c.h.b16 %v46
    %v105 = vunpack.c.l.b16 %v47
    %v106 = vunpack.c.h.b16 %v47
    %v107 = vunpack.c.l.b16 %v48
    %v108 = vunpack.c.h.b16 %v48
    %v109 = vunpack.c.l.b16 %v49
    %v110 = vunpack.c.h.b16 %v49
    %v111 = vunpack.c.l.b16 %v50
    %v112 = vunpack.c.h.b16 %v50
    %v113 = vunpack.c.l.b16 %v51
    %v114 = vunpack.c.h.b16 %v51
    %v115 = vpack.c.b16 %v101, %v99
    %v116 = vpack.c.b16 %v102, %v100
    %v117 = vpack.c.b16 %v105, %v103
    %v118 = vpack.c.b16 %v106, %v104
    %v119 = vpack.c.b16 %v109, %v107
    %v120 = vpack.c.b16 %v110, %v108
    %v121 = vpack.c.b16 %v113, %v111
    %v122 = vpack.c.b16 %v114, %v112
    %v163 = vunpack.c.l.b16 %v52
    %v164 = vunpack.c.l.b16 %v53
    %v165 = vunpack.c.l.b16 %v54
    %v166 = vunpack.c.l.b16 %v55
    %v167 = vunpack.c.l.b16 %v56
    %v168 = vunpack.c.l.b16 %v57
    %v169 = vunpack.c.l.b16 %v58
    %v170 = vunpack.c.l.b16 %v59
    %v171 = vunpack.c.l.b16 %v60
    %v172 = vunpack.c.l.b16 %v61
    %v173 = vunpack.c.l.b16 %v62
    %v174 = vunpack.c.l.b16 %v63
    %v175 = vunpack.c.l.b16 %v64
    %v176 = vunpack.c.l.b16 %v65
    %v177 = vunpack.c.l.b16 %v66
    %v178 = vunpack.c.l.b16 %v67
    %v179 = vunpack.c.l.b16 %v68
    %v180 = vunpack.c.l.b16 %v69
    %v181 = vunpack.c.l.b16 %v70
    %v182 = vunpack.c.l.b16 %v71
    %v183 = vunpack.c.l.b16 %v72
    %v184 = vunpack.c.l.b16 %v73
    %v185 = vunpack.c.l.b16 %v74
    %v186 = vunpack.c.l.b16 %v75
    %v187 = vunpack.c.l.b16 %v76
    %v188 = vunpack.c.l.b16 %v77
    %v189 = vunpack.c.l.b16 %v78
    %v190 = vunpack.c.l.b16 %v79
    %v191 = vunpack.c.l.b16 %v80
    %v192 = vunpack.c.l.b16 %v81
    %v193 = vunpack.c.l.b16 %v82
    %v194 = vunpack.c.l.b16 %v83
    %v195 = vpack.c.b16 %v164, %v163
    %v196 = vpack.c.b16 %v166, %v165
    %v197 = vpack.c.b16 %v168, %v167
    %v198 = vpack.c.b16 %v170, %v169
    %v199 = vpack.c.b16 %v172, %v171
    %v200 = vpack.c.b16 %v174, %v173
    %v201 = vpack.c.b16 %v176, %v175
    %v202 = vpack.c.b16 %v178, %v177
    %v203 = vpack.c.b16 %v180, %v179
    %v204 = vpack.c.b16 %v182, %v181
    %v205 = vpack.c.b16 %v184, %v183
    %v206 = vpack.c.b16 %v186, %v185
    %v207 = vpack.c.b16 %v188, %v187
    %v208 = vpack.c.b16 %v190, %v189
    %v209 = vpack.c.b16 %v192, %v191
    %v210 = vpack.c.b16 %v194, %v193
    %227 = vmatprep.subr.bf16.mxu0 0
    %228 = vmatpush1.bf16.msra.mxu0 %v195
    %229 = vmatprep.subr.bf16.mxu0 0
    %230 = vmatpush1.bf16.msra.mxu0 %v196
    %231 = vmatprep.subr.bf16.mxu0 0
    %232 = vmatpush1.bf16.msra.mxu0 %v197
    %233 = vmatprep.subr.bf16.mxu0 0
    %234 = vmatpush1.bf16.msra.mxu0 %v198
    %235 = vmatprep.subr.bf16.mxu0 0
    %236 = vmatpush1.bf16.msra.mxu0 %v199
    %237 = vmatprep.subr.bf16.mxu0 0
    %238 = vmatpush1.bf16.msra.mxu0 %v200
    %239 = vmatprep.subr.bf16.mxu0 0
    %240 = vmatpush1.bf16.msra.mxu0 %v201
    %241 = vmatprep.subr.bf16.mxu0 0
    %242 = vmatpush1.bf16.msra.mxu0 %v202
    %243 = vmatprep.subr.bf16.mxu0 0
    %244 = vmatpush1.bf16.msra.mxu0 %v203
    %245 = vmatprep.subr.bf16.mxu0 0
    %246 = vmatpush1.bf16.msra.mxu0 %v204
    %247 = vmatprep.subr.bf16.mxu0 0
    %248 = vmatpush1.bf16.msra.mxu0 %v205
    %249 = vmatprep.subr.bf16.mxu0 0
    %250 = vmatpush1.bf16.msra.mxu0 %v206
    %251 = vmatprep.subr.bf16.mxu0 0
    %252 = vmatpush1.bf16.msra.mxu0 %v207
    %253 = vmatprep.subr.bf16.mxu0 0
    %254 = vmatpush1.bf16.msra.mxu0 %v208
    %255 = vmatprep.subr.bf16.mxu0 0
    %256 = vmatpush1.bf16.msra.mxu0 %v209
    %257 = vmatprep.subr.bf16.mxu0 0
    %258 = vmatpush1.bf16.msra.mxu0 %v210
    %259 = vmatprep.mubr.bf16.mxu0 %v116
    %260 = vmatmul.mubr.bf16.gmra.mrb[0].mxu0 %v115
    %v261 = vpop.f32.mrb[0].mxu0
    %v262 = vadd.f32 %v89, %v261
    %v263 = vpop.f32.mrb[0].mxu0
    %v264 = vpop.f32.mrb[0].mxu0
    %v265 = vadd.f32 %v89, %v264
    %v266 = vpop.f32.mrb[0].mxu0
    %267 = vmatprep.mubr.bf16.mxu0 %v118
    %268 = vmatmul.mubr.bf16.gmra.mrb[0].mxu0 %v117
    %v269 = vpop.f32.mrb[0].mxu0
    %v270 = vadd.f32 %v89, %v269
    %v271 = vpop.f32.mrb[0].mxu0
    %v272 = vpop.f32.mrb[0].mxu0
    %v273 = vadd.f32 %v89, %v272
    %v274 = vpop.f32.mrb[0].mxu0
    %275 = vmatprep.mubr.bf16.mxu0 %v120
    %276 = vmatmul.mubr.bf16.gmra.mrb[0].mxu0 %v119
    %v277 = vpop.f32.mrb[0].mxu0
    %v278 = vadd.f32 %v89, %v277
    %v279 = vpop.f32.mrb[0].mxu0
    %v280 = vpop.f32.mrb[0].mxu0
    %v281 = vadd.f32 %v89, %v280
    %v282 = vpop.f32.mrb[0].mxu0
    %283 = vmatprep.mubr.bf16.mxu0 %v122
    %284 = vmatmul.mubr.bf16.gmra.mrb[0].mxu0 %v121
    %v285 = vpop.f32.mrb[0].mxu0
    %v286 = vadd.f32 %v89, %v285
    %v287 = vpop.f32.mrb[0].mxu0
    %v288 = vpop.f32.mrb[0].mxu0
    %v289 = vadd.f32 %v89, %v288
    %v290 = vpop.f32.mrb[0].mxu0
    %291 = vdwg.mxu0
    %v292 = vmax.f32 %v262, 0.0
    %v293 = vmax.f32 %v265, 0.0
    %v294 = vmax.f32 %v270, 0.0
    %v295 = vmax.f32 %v273, 0.0
    %v296 = vmax.f32 %v278, 0.0
    %v297 = vmax.f32 %v281, 0.0
    %v298 = vmax.f32 %v286, 0.0
    %v299 = vmax.f32 %v289, 0.0
    %300 = vst [vmem:[#allocation7] sm:$0xff] %v292
    %301 = vst [vmem:[#allocation7 + $0x8] sm:$0xff] %v293
    %302 = vst [vmem:[#allocation7 + $0x10] sm:$0xff] %v294
    %303 = vst [vmem:[#allocation7 + $0x18] sm:$0xff] %v295
    %304 = vst [vmem:[#allocation7 + $0x20] sm:$0xff] %v296
    %305 = vst [vmem:[#allocation7 + $0x28] sm:$0xff] %v297
    %306 = vst [vmem:[#allocation7 + $0x30] sm:$0xff] %v298
    %307 = vst [vmem:[#allocation7 + $0x38] sm:$0xff] %v299
    // Predicated region
    $region22: #{tpu_custom_call.1} parent=1 // pred_check
      _
    $region23: #{tpu_custom_call.1} parent=1 // pred_check_branch
      %309 = sbr.rel (0) target = $region25
    $region24: #{tpu_custom_call.1} parent=1 // pred_region
      %s311 = ssub.s32 1024, 1024
      %312 = vsyncadd [#allocation4], %s311
      %s313 = sshll.u32 [#allocation7], 4
      %s314 = int_to_ptr.vmem [resolvable:$true] %s313
      %319 = dma.vmem_to_hbm [thread:$0]  %s314, 1024, %s3, [#allocation4], 128, 128, 8
    $region25: #{tpu_custom_call.1} parent=1 // pred_fallthru
      _
    // Predicated region
    $region26: #{tpu_custom_call.1} parent=1 // pred_check
      _
    $region27: #{tpu_custom_call.1} parent=1 // pred_check_branch
      %321 = sbr.rel (0) target = $region29
    $region28: #{tpu_custom_call.1} parent=1 // pred_region
      %322 = dma.done [#allocation4], 1024
    $region29: #{tpu_custom_call.1} parent=1 // pred_fallthru
      _
    %323 = vsyncpa [#allocation3], 1
    %324 = vsyncpa [#allocation6], 1
    %325 = vsyncpa [#allocation4], 1

</llo_original>
